<compile_context>
chip_gen: v7x
topology: tpu7x:2x2x1
jax: 0.10.0
libtpu: 0.0.40
codegen_flags: <defaults>
</compile_context>

<pallas_src>
import jax
import jax.numpy as jnp
from jax.experimental import pallas as pl
from jax.experimental.pallas import tpu as pltpu

# ----------------------------- configuration (small demo shapes) ------------------
B = 2            # batch
C = 4            # image channels
IMG = 16         # spatial H = W
FEAT = 32        # backbone feature dim (stands in for 2048 of resnet50); 4*FEAT = 128 = MXU K
HID = 128        # classifier hidden size, lane-aligned (stands in for 512)
NCLS = 2         # binary classifier output
NCLS_PAD = 128   # lane-dense padded logits width
TB = 8           # batch tile (rows per grid step); 128/256 at real batch sizes


# ----------------------------- fused Pallas kernel --------------------------------
def _mcan_kernel(xl_ref, xr_ref, wemb_ref, bemb_ref, wp_ref, hww_ref, hwb_ref,
                 wo_ref, bo_ref, o_ref):
    """Fused backbone(left,right) + concat-mul-diff + 2-layer highway + linear + log_softmax.

    xl_ref / xr_ref : [TB, C, HW] bf16  left / right image tiles, spatial on the lane axis
    wemb_ref        : [C, FEAT]   bf16  backbone stand-in embedding weight (shared L/R)
    bemb_ref        : [1, FEAT]   f32   backbone stand-in embedding bias
    wp_ref          : [4*FEAT, HID] bf16  merge projection for concat([l,r,l*r,l-r])
    hww_ref         : [4, HID, HID] bf16  packed highway weights (w1h, w1t, w2h, w2t)
    hwb_ref         : [8, HID]    f32   packed biases: rows 0..4 = (bp, b1h, b1t, b2h, b2t)
    wo_ref          : [HID, NCLS_PAD] bf16  final linear, columns >= NCLS are zero
    bo_ref          : [1, NCLS_PAD]   f32   final bias, columns >= NCLS are -1e30
    o_ref           : [TB, NCLS_PAD]  f32   lane-dense log-softmax output
    """
    # ---- backbone stand-in: spatial average pool (full-lane reduce, f32 accumulation)
    pooled_l = jnp.mean(xl_ref[...].astype(jnp.float32), axis=-1)        # [TB, C]
    pooled_r = jnp.mean(xr_ref[...].astype(jnp.float32), axis=-1)        # [TB, C]

    wemb = wemb_ref[...]                                                 # bf16 [C, FEAT]
    bemb = bemb_ref[...]                                                 # f32  [1, FEAT]
    l = jnp.dot(pooled_l.astype(jnp.bfloat16), wemb,
                preferred_element_type=jnp.float32) + bemb               # [TB, FEAT] f32
    r = jnp.dot(pooled_r.astype(jnp.bfloat16), wemb,
                preferred_element_type=jnp.float32) + bemb               # [TB, FEAT] f32

    hwb = hwb_ref[...]                                                   # f32 [8, HID]

    # ---- 'concat-mul-diff' merge: one K = 4*FEAT matmul (products formed in f32,
    #      only the matmul operand is cast to bf16).
    merged = jnp.concatenate([l, r, l * r, l - r], axis=-1)              # [TB, 4*FEAT] f32
    xh = jnp.dot(merged.astype(jnp.bfloat16), wp_ref[...],
                 preferred_element_type=jnp.float32) + hwb[0:1, :]       # [TB, HID] f32

    # ---- 2-layer highway (gate math in f32, matmul operands bf16)
    def highway(x, w_h, w_t, b_h, b_t):
        xb = x.astype(jnp.bfloat16)
        h = jax.nn.relu(jnp.dot(xb, w_h, preferred_element_type=jnp.float32) + b_h)
        t = jax.nn.sigmoid(jnp.dot(xb, w_t, preferred_element_type=jnp.float32) + b_t)
        return t * h + (1.0 - t) * x

    xh = highway(xh, hww_ref[0], hww_ref[1], hwb[1:2, :], hwb[2:3, :])
    xh = highway(xh, hww_ref[2], hww_ref[3], hwb[3:4, :], hwb[4:5, :])

    # ---- softmax_transform: Linear(HID -> 2), padded lane-dense to 128 columns.
    # Pad columns get bias -1e30 so they vanish from the log-sum-exp below.
    logits = jnp.dot(xh.astype(jnp.bfloat16), wo_ref[...],
                     preferred_element_type=jnp.float32) + bo_ref[...]   # [TB, NCLS_PAD]

    # ---- stable LogSoftmax over the (padded) class axis — full-128-lane reduce.
    m = jnp.max(logits, axis=-1, keepdims=True)
    lse = m + jnp.log(jnp.sum(jnp.exp(logits - m), axis=-1, keepdims=True))
    o_ref[...] = logits - lse


# ----------------------------- pallas_call wrapper ---------------------------------
def mcan_reid_forward(left, right, params):
    """left/right: NCHW float32 [B, C, IMG, IMG] -> log-probs [B, 2]."""
    b, c, h, w = left.shape
    hw = h * w

    # NCHW -> [B, C, HW] bf16: contiguous reshape (no transpose) + cast; no pad / concat —
    # batch-row padding happens at the BlockSpec/grid boundary inside the kernel.
    def prep(x):
        return x.reshape(b, c, hw).astype(jnp.bfloat16)

    xl = prep(left)
    xr = prep(right)

    n_tiles = pl.cdiv(b, TB)
    bpad = n_tiles * TB

    grid_spec = pltpu.PrefetchScalarGridSpec(
        num_scalar_prefetch=0,
        grid=(n_tiles,),
        in_specs=[
            pl.BlockSpec((TB, c, hw), lambda i: (i, 0, 0)),      # left image tile
            pl.BlockSpec((TB, c, hw), lambda i: (i, 0, 0)),      # right image tile
            pl.BlockSpec((c, FEAT), lambda i: (0, 0)),           # wemb  (resident)
            pl.BlockSpec((1, FEAT), lambda i: (0, 0)),           # bemb  (resident)
            pl.BlockSpec((4 * FEAT, HID), lambda i: (0, 0)),     # wp    (resident)
            pl.BlockSpec((4, HID, HID), lambda i: (0, 0, 0)),    # hw_w  (resident)
            pl.BlockSpec((8, HID), lambda i: (0, 0)),            # hw_b  (resident)
            pl.BlockSpec((HID, NCLS_PAD), lambda i: (0, 0)),     # wo_pad (resident)
            pl.BlockSpec((1, NCLS_PAD), lambda i: (0, 0)),       # bo_pad (resident)
        ],
        out_specs=pl.BlockSpec((TB, NCLS_PAD), lambda i: (i, 0)),
    )

    flops = 2 * (2 * bpad * c * FEAT            # shared embedding (left + right)
                 + bpad * 4 * FEAT * HID        # fused merge projection
                 + 4 * bpad * HID * HID         # highway matmuls
                 + bpad * HID * NCLS_PAD)       # final linear
    transcendentals = bpad * (2 * HID + NCLS_PAD)
    bytes_accessed = (2 * b * c * hw * 2                                   # bf16 images
                      + (c * FEAT + 4 * FEAT * HID + 4 * HID * HID
                         + HID * NCLS_PAD) * 2                             # bf16 weights
                      + (FEAT + 8 * HID + NCLS_PAD) * 4                    # f32 biases
                      + bpad * NCLS_PAD * 4)                               # f32 output

    out_pad = pl.pallas_call(
        _mcan_kernel,
        out_shape=jax.ShapeDtypeStruct((bpad, NCLS_PAD), jnp.float32),
        grid_spec=grid_spec,
        compiler_params=pltpu.CompilerParams(
            dimension_semantics=("parallel",)),     # shards batch tiles across v7x's 2 TCs
        cost_estimate=pl.CostEstimate(flops=flops,
                                      transcendentals=transcendentals,
                                      bytes_accessed=bytes_accessed),
    )(xl, xr,
      params["w_emb"], params["b_emb"],
      params["wp"],
      params["hw_w"], params["hw_b"],
      params["wo_pad"], params["bo_pad"])

    return out_pad[:b, :NCLS]


# ----------------------------- deterministic parameter init ------------------------
def init_params(key):
    ks = jax.random.split(key, 8)

    def w(k, shape, fan_in):
        return (jax.random.normal(k, shape, jnp.float32)
                / jnp.sqrt(jnp.float32(fan_in))).astype(jnp.bfloat16)

    # packed highway weights: rows = (w1h, w1t, w2h, w2t)
    hw_w = jnp.stack([w(ks[2], (HID, HID), HID),
                      w(ks[3], (HID, HID), HID),
                      w(ks[4], (HID, HID), HID),
                      w(ks[5], (HID, HID), HID)], axis=0)             # [4, HID, HID] bf16

    # packed biases (f32, added after f32 accumulation): rows 0..4 = (bp, b1h, b1t, b2h, b2t)
    # highway gate biases initialized to -1
    hw_b = jnp.zeros((8, HID), jnp.float32)
    hw_b = hw_b.at[2].set(-1.0).at[4].set(-1.0)

    # final linear padded lane-dense to 128 columns; pad bias = -1e30 masks pad classes
    wo = w(ks[6], (HID, NCLS), HID)
    wo_pad = jnp.zeros((HID, NCLS_PAD), jnp.bfloat16).at[:, :NCLS].set(wo)
    bo_pad = jnp.full((1, NCLS_PAD), -1e30, jnp.float32).at[:, :NCLS].set(0.0)

    return {
        # backbone stand-in
        "w_emb": w(ks[0], (C, FEAT), C),                              # bf16
        "b_emb": jnp.zeros((1, FEAT), jnp.float32),
        # fused merge projection: concat([l,r,l*r,l-r]) @ wp, single [4*FEAT, HID] matrix
        "wp": w(ks[1], (4 * FEAT, HID), 4 * FEAT),                    # bf16
        # packed highway weights / biases
        "hw_w": hw_w,
        "hw_b": hw_b,
        # final linear to 2 classes (lane-dense padded)
        "wo_pad": wo_pad,
        "bo_pad": bo_pad,
    }


# ----------------------------- main ------------------------------------------------
if __name__ == "__main__":
    key = jax.random.PRNGKey(0)
    k_left, k_right, k_params = jax.random.split(key, 3)

    left = jax.random.normal(k_left, (B, C, IMG, IMG), jnp.float32)
    right = jax.random.normal(k_right, (B, C, IMG, IMG), jnp.float32)
    params = init_params(k_params)

    out = jax.jit(mcan_reid_forward)(left, right, params)
    out = jax.block_until_ready(out)

    assert out.shape == (B, NCLS)
    assert bool(jnp.all(jnp.isfinite(out)))
    # log_softmax rows must exponentiate-sum to 1
    assert jnp.allclose(jnp.sum(jnp.exp(out), axis=1), 1.0, atol=1e-5)
    print("KERNEL_OK")
</pallas_src>

<mosaic_0001>
module attributes {stable_mosaic.version = 11 : i64} {
  func.func @_mcan_kernel(%arg0: i32, %arg1: memref<8x4x256xbf16, #tpu.memory_space<vmem>>, %arg2: memref<8x4x256xbf16, #tpu.memory_space<vmem>>, %arg3: memref<4x32xbf16, #tpu.memory_space<vmem>>, %arg4: memref<1x32xf32, #tpu.memory_space<vmem>>, %arg5: memref<128x128xbf16, #tpu.memory_space<vmem>>, %arg6: memref<4x128x128xbf16, #tpu.memory_space<vmem>>, %arg7: memref<8x128xf32, #tpu.memory_space<vmem>>, %arg8: memref<128x128xbf16, #tpu.memory_space<vmem>>, %arg9: memref<1x128xf32, #tpu.memory_space<vmem>>, %arg10: memref<8x128xf32, #tpu.memory_space<vmem>>) attributes {dimension_semantics = [#tpu.dimension_semantics<parallel>], iteration_bounds = array<i64: 1>, scalar_prefetch = 0 : i64, scratch_operands = 0 : i64, tpu.core_type = #tpu.core_type<tc>, window_params = [{transform_indices = @transform_0, window_bounds = array<i64: 8, 4, 256>}, {transform_indices = @transform_1, window_bounds = array<i64: 8, 4, 256>}, {pipeline_mode = #tpu.pipeline_mode<synchronous>, transform_indices = @transform_2, window_bounds = array<i64: 4, 32>}, {pipeline_mode = #tpu.pipeline_mode<synchronous>, transform_indices = @transform_3, window_bounds = array<i64: 1, 32>}, {pipeline_mode = #tpu.pipeline_mode<synchronous>, transform_indices = @transform_4, window_bounds = array<i64: 128, 128>}, {pipeline_mode = #tpu.pipeline_mode<synchronous>, transform_indices = @transform_5, window_bounds = array<i64: 4, 128, 128>}, {pipeline_mode = #tpu.pipeline_mode<synchronous>, transform_indices = @transform_6, window_bounds = array<i64: 8, 128>}, {pipeline_mode = #tpu.pipeline_mode<synchronous>, transform_indices = @transform_7, window_bounds = array<i64: 128, 128>}, {pipeline_mode = #tpu.pipeline_mode<synchronous>, transform_indices = @transform_8, window_bounds = array<i64: 1, 128>}, {transform_indices = @transform_9, window_bounds = array<i64: 8, 128>}]} {
    %c0 = arith.constant 0 : index
    %c0_0 = arith.constant 0 : index
    %c0_1 = arith.constant 0 : index
    %0 = vector.load %arg1[%c0, %c0_0, %c0_1] : memref<8x4x256xbf16, #tpu.memory_space<vmem>>, vector<8x4x256xbf16>
    %1 = arith.extf %0 : vector<8x4x256xbf16> to vector<8x4x256xf32>
    %cst = arith.constant dense<0.000000e+00> : vector<8x4xf32>
    %2 = vector.multi_reduction <add>, %1, %cst [2] : vector<8x4x256xf32> to vector<8x4xf32>
    %cst_2 = arith.constant 2.560000e+02 : f32
    %3 = vector.broadcast %cst_2 : f32 to vector<8x4xf32>
    %4 = arith.divf %2, %3 : vector<8x4xf32>
    %c0_3 = arith.constant 0 : index
    %c0_4 = arith.constant 0 : index
    %c0_5 = arith.constant 0 : index
    %5 = vector.load %arg2[%c0_3, %c0_4, %c0_5] : memref<8x4x256xbf16, #tpu.memory_space<vmem>>, vector<8x4x256xbf16>
    %6 = arith.extf %5 : vector<8x4x256xbf16> to vector<8x4x256xf32>
    %cst_6 = arith.constant dense<0.000000e+00> : vector<8x4xf32>
    %7 = vector.multi_reduction <add>, %6, %cst_6 [2] : vector<8x4x256xf32> to vector<8x4xf32>
    %cst_7 = arith.constant 2.560000e+02 : f32
    %8 = vector.broadcast %cst_7 : f32 to vector<8x4xf32>
    %9 = arith.divf %7, %8 : vector<8x4xf32>
    %c0_8 = arith.constant 0 : index
    %c0_9 = arith.constant 0 : index
    %10 = vector.load %arg3[%c0_8, %c0_9] : memref<4x32xbf16, #tpu.memory_space<vmem>>, vector<4x32xbf16>
    %c0_10 = arith.constant 0 : index
    %c0_11 = arith.constant 0 : index
    %11 = vector.load %arg4[%c0_10, %c0_11] : memref<1x32xf32, #tpu.memory_space<vmem>>, vector<1x32xf32>
    %12 = arith.truncf %4 : vector<8x4xf32> to vector<8x4xbf16>
    %cst_12 = arith.constant dense<0.000000e+00> : vector<8x32xf32>
    %13 = tpu.matmul %12, %10, %cst_12 {dimension_numbers = #tpu.dot_dimension_numbers<[1], [0], [0], [1], [0, 0, 1, 1], [], []>} : vector<8x4xbf16>, vector<4x32xbf16>, vector<8x32xf32> -> vector<8x32xf32>
    %14 = vector.broadcast %11 : vector<1x32xf32> to vector<8x32xf32>
    %15 = arith.addf %13, %14 : vector<8x32xf32>
    %16 = arith.truncf %9 : vector<8x4xf32> to vector<8x4xbf16>
    %cst_13 = arith.constant dense<0.000000e+00> : vector<8x32xf32>
    %17 = tpu.matmul %16, %10, %cst_13 {dimension_numbers = #tpu.dot_dimension_numbers<[1], [0], [0], [1], [0, 0, 1, 1], [], []>} : vector<8x4xbf16>, vector<4x32xbf16>, vector<8x32xf32> -> vector<8x32xf32>
    %18 = vector.broadcast %11 : vector<1x32xf32> to vector<8x32xf32>
    %19 = arith.addf %17, %18 : vector<8x32xf32>
    %c0_14 = arith.constant 0 : index
    %c0_15 = arith.constant 0 : index
    %20 = vector.load %arg7[%c0_14, %c0_15] : memref<8x128xf32, #tpu.memory_space<vmem>>, vector<8x128xf32>
    %21 = arith.mulf %15, %19 : vector<8x32xf32>
    %22 = arith.subf %15, %19 : vector<8x32xf32>
    %23 = tpu.concatenate %15, %19, %21, %22 in 1 : vector<8x32xf32>, vector<8x32xf32>, vector<8x32xf32>, vector<8x32xf32> -> vector<8x128xf32>
    %24 = arith.truncf %23 : vector<8x128xf32> to vector<8x128xbf16>
    %c0_16 = arith.constant 0 : index
    %c0_17 = arith.constant 0 : index
    %25 = vector.load %arg5[%c0_16, %c0_17] : memref<128x128xbf16, #tpu.memory_space<vmem>>, vector<128x128xbf16>
    %cst_18 = arith.constant dense<0.000000e+00> : vector<8x128xf32>
    %26 = tpu.matmul %24, %25, %cst_18 {dimension_numbers = #tpu.dot_dimension_numbers<[1], [0], [0], [1], [0, 0, 1, 1], [], []>} : vector<8x128xbf16>, vector<128x128xbf16>, vector<8x128xf32> -> vector<8x128xf32>
    %27 = vector.extract_strided_slice %20 {offsets = [0, 0], sizes = [1, 128], strides = [1, 1]} : vector<8x128xf32> to vector<1x128xf32>
    %28 = vector.broadcast %27 : vector<1x128xf32> to vector<8x128xf32>
    %29 = arith.addf %26, %28 : vector<8x128xf32>
    %c0_19 = arith.constant 0 : index
    %c0_20 = arith.constant 0 : index
    %c0_21 = arith.constant 0 : index
    %30 = vector.load %arg6[%c0_19, %c0_20, %c0_21] : memref<4x128x128xbf16, #tpu.memory_space<vmem>>, vector<1x128x128xbf16>
    %31 = vector.shape_cast %30 : vector<1x128x128xbf16> to vector<128x128xbf16>
    %c1 = arith.constant 1 : index
    %c0_22 = arith.constant 0 : index
    %c0_23 = arith.constant 0 : index
    %32 = vector.load %arg6[%c1, %c0_22, %c0_23] : memref<4x128x128xbf16, #tpu.memory_space<vmem>>, vector<1x128x128xbf16>
    %33 = vector.shape_cast %32 : vector<1x128x128xbf16> to vector<128x128xbf16>
    %34 = vector.extract_strided_slice %20 {offsets = [1, 0], sizes = [1, 128], strides = [1, 1]} : vector<8x128xf32> to vector<1x128xf32>
    %35 = vector.extract_strided_slice %20 {offsets = [2, 0], sizes = [1, 128], strides = [1, 1]} : vector<8x128xf32> to vector<1x128xf32>
    %36 = arith.truncf %29 : vector<8x128xf32> to vector<8x128xbf16>
    %cst_24 = arith.constant dense<0.000000e+00> : vector<8x128xf32>
    %37 = tpu.matmul %36, %31, %cst_24 {dimension_numbers = #tpu.dot_dimension_numbers<[1], [0], [0], [1], [0, 0, 1, 1], [], []>} : vector<8x128xbf16>, vector<128x128xbf16>, vector<8x128xf32> -> vector<8x128xf32>
    %38 = vector.broadcast %34 : vector<1x128xf32> to vector<8x128xf32>
    %39 = arith.addf %37, %38 : vector<8x128xf32>
    %cst_25 = arith.constant 0.000000e+00 : f32
    %40 = vector.broadcast %cst_25 : f32 to vector<8x128xf32>
    %41 = arith.maximumf %39, %40 : vector<8x128xf32>
    %cst_26 = arith.constant dense<0.000000e+00> : vector<8x128xf32>
    %42 = tpu.matmul %36, %33, %cst_26 {dimension_numbers = #tpu.dot_dimension_numbers<[1], [0], [0], [1], [0, 0, 1, 1], [], []>} : vector<8x128xbf16>, vector<128x128xbf16>, vector<8x128xf32> -> vector<8x128xf32>
    %43 = vector.broadcast %35 : vector<1x128xf32> to vector<8x128xf32>
    %44 = arith.addf %42, %43 : vector<8x128xf32>
    %45 = arith.negf %44 : vector<8x128xf32>
    %46 = math.exp %45 : vector<8x128xf32>
    %cst_27 = arith.constant 1.000000e+00 : f32
    %47 = vector.broadcast %cst_27 : f32 to vector<8x128xf32>
    %48 = arith.addf %47, %46 : vector<8x128xf32>
    %49 = arith.divf %47, %48 : vector<8x128xf32>
    %50 = arith.mulf %49, %41 : vector<8x128xf32>
    %cst_28 = arith.constant 1.000000e+00 : f32
    %51 = vector.broadcast %cst_28 : f32 to vector<8x128xf32>
    %52 = arith.subf %51, %49 : vector<8x128xf32>
    %53 = arith.mulf %52, %29 : vector<8x128xf32>
    %54 = arith.addf %50, %53 : vector<8x128xf32>
    %c2 = arith.constant 2 : index
    %c0_29 = arith.constant 0 : index
    %c0_30 = arith.constant 0 : index
    %55 = vector.load %arg6[%c2, %c0_29, %c0_30] : memref<4x128x128xbf16, #tpu.memory_space<vmem>>, vector<1x128x128xbf16>
    %56 = vector.shape_cast %55 : vector<1x128x128xbf16> to vector<128x128xbf16>
    %c3 = arith.constant 3 : index
    %c0_31 = arith.constant 0 : index
    %c0_32 = arith.constant 0 : index
    %57 = vector.load %arg6[%c3, %c0_31, %c0_32] : memref<4x128x128xbf16, #tpu.memory_space<vmem>>, vector<1x128x128xbf16>
    %58 = vector.shape_cast %57 : vector<1x128x128xbf16> to vector<128x128xbf16>
    %59 = vector.extract_strided_slice %20 {offsets = [3, 0], sizes = [1, 128], strides = [1, 1]} : vector<8x128xf32> to vector<1x128xf32>
    %60 = vector.extract_strided_slice %20 {offsets = [4, 0], sizes = [1, 128], strides = [1, 1]} : vector<8x128xf32> to vector<1x128xf32>
    %61 = arith.truncf %54 : vector<8x128xf32> to vector<8x128xbf16>
    %cst_33 = arith.constant dense<0.000000e+00> : vector<8x128xf32>
    %62 = tpu.matmul %61, %56, %cst_33 {dimension_numbers = #tpu.dot_dimension_numbers<[1], [0], [0], [1], [0, 0, 1, 1], [], []>} : vector<8x128xbf16>, vector<128x128xbf16>, vector<8x128xf32> -> vector<8x128xf32>
    %63 = vector.broadcast %59 : vector<1x128xf32> to vector<8x128xf32>
    %64 = arith.addf %62, %63 : vector<8x128xf32>
    %cst_34 = arith.constant 0.000000e+00 : f32
    %65 = vector.broadcast %cst_34 : f32 to vector<8x128xf32>
    %66 = arith.maximumf %64, %65 : vector<8x128xf32>
    %cst_35 = arith.constant dense<0.000000e+00> : vector<8x128xf32>
    %67 = tpu.matmul %61, %58, %cst_35 {dimension_numbers = #tpu.dot_dimension_numbers<[1], [0], [0], [1], [0, 0, 1, 1], [], []>} : vector<8x128xbf16>, vector<128x128xbf16>, vector<8x128xf32> -> vector<8x128xf32>
    %68 = vector.broadcast %60 : vector<1x128xf32> to vector<8x128xf32>
    %69 = arith.addf %67, %68 : vector<8x128xf32>
    %70 = arith.negf %69 : vector<8x128xf32>
    %71 = math.exp %70 : vector<8x128xf32>
    %cst_36 = arith.constant 1.000000e+00 : f32
    %72 = vector.broadcast %cst_36 : f32 to vector<8x128xf32>
    %73 = arith.addf %72, %71 : vector<8x128xf32>
    %74 = arith.divf %72, %73 : vector<8x128xf32>
    %75 = arith.mulf %74, %66 : vector<8x128xf32>
    %cst_37 = arith.constant 1.000000e+00 : f32
    %76 = vector.broadcast %cst_37 : f32 to vector<8x128xf32>
    %77 = arith.subf %76, %74 : vector<8x128xf32>
    %78 = arith.mulf %77, %54 : vector<8x128xf32>
    %79 = arith.addf %75, %78 : vector<8x128xf32>
    %80 = arith.truncf %79 : vector<8x128xf32> to vector<8x128xbf16>
    %c0_38 = arith.constant 0 : index
    %c0_39 = arith.constant 0 : index
    %81 = vector.load %arg8[%c0_38, %c0_39] : memref<128x128xbf16, #tpu.memory_space<vmem>>, vector<128x128xbf16>
    %cst_40 = arith.constant dense<0.000000e+00> : vector<8x128xf32>
    %82 = tpu.matmul %80, %81, %cst_40 {dimension_numbers = #tpu.dot_dimension_numbers<[1], [0], [0], [1], [0, 0, 1, 1], [], []>} : vector<8x128xbf16>, vector<128x128xbf16>, vector<8x128xf32> -> vector<8x128xf32>
    %c0_41 = arith.constant 0 : index
    %c0_42 = arith.constant 0 : index
    %83 = vector.load %arg9[%c0_41, %c0_42] : memref<1x128xf32, #tpu.memory_space<vmem>>, vector<1x128xf32>
    %84 = vector.broadcast %83 : vector<1x128xf32> to vector<8x128xf32>
    %85 = arith.addf %82, %84 : vector<8x128xf32>
    %cst_43 = arith.constant dense<0xFF800000> : vector<8xf32>
    %86 = vector.multi_reduction <maximumf>, %85, %cst_43 [1] : vector<8x128xf32> to vector<8xf32>
    %87 = vector.shape_cast %86 : vector<8xf32> to vector<8x1xf32>
    %88 = vector.broadcast %87 : vector<8x1xf32> to vector<8x128xf32>
    %89 = arith.subf %85, %88 : vector<8x128xf32>
    %90 = math.exp %89 : vector<8x128xf32>
    %cst_44 = arith.constant dense<0.000000e+00> : vector<8xf32>
    %91 = vector.multi_reduction <add>, %90, %cst_44 [1] : vector<8x128xf32> to vector<8xf32>
    %92 = vector.shape_cast %91 : vector<8xf32> to vector<8x1xf32>
    %93 = math.log %92 : vector<8x1xf32>
    %94 = arith.addf %87, %93 : vector<8x1xf32>
    %95 = vector.broadcast %94 : vector<8x1xf32> to vector<8x128xf32>
    %96 = arith.subf %85, %95 : vector<8x128xf32>
    %c0_45 = arith.constant 0 : index
    %c0_46 = arith.constant 0 : index
    %97 = vector.load %arg10[%c0_45, %c0_46] : memref<8x128xf32, #tpu.memory_space<vmem>>, vector<8x128xf32>
    tpu.vector_store %arg10[%c0_45, %c0_46], %96 {strides = array<i32>} : memref<8x128xf32, #tpu.memory_space<vmem>>, vector<8x128xf32>,
    return
  }
  func.func @transform_0(%arg0: i32) -> (i32, i32, i32) {
    %c0_i32 = arith.constant 0 : i32
    %c0_i32_0 = arith.constant 0 : i32
    %c0_i32_1 = arith.constant 0 : i32
    return %arg0, %c0_i32, %c0_i32_0 : i32, i32, i32
  }
  func.func @transform_1(%arg0: i32) -> (i32, i32, i32) {
    %c0_i32 = arith.constant 0 : i32
    %c0_i32_0 = arith.constant 0 : i32
    %c0_i32_1 = arith.constant 0 : i32
    return %arg0, %c0_i32, %c0_i32_0 : i32, i32, i32
  }
  func.func @transform_2(%arg0: i32) -> (i32, i32) {
    %c0_i32 = arith.constant 0 : i32
    %c0_i32_0 = arith.constant 0 : i32
    %c0_i32_1 = arith.constant 0 : i32
    return %c0_i32, %c0_i32_0 : i32, i32
  }
  func.func @transform_3(%arg0: i32) -> (i32, i32) {
    %c0_i32 = arith.constant 0 : i32
    %c0_i32_0 = arith.constant 0 : i32
    %c0_i32_1 = arith.constant 0 : i32
    return %c0_i32, %c0_i32_0 : i32, i32
  }
  func.func @transform_4(%arg0: i32) -> (i32, i32) {
    %c0_i32 = arith.constant 0 : i32
    %c0_i32_0 = arith.constant 0 : i32
    %c0_i32_1 = arith.constant 0 : i32
    return %c0_i32, %c0_i32_0 : i32, i32
  }
  func.func @transform_5(%arg0: i32) -> (i32, i32, i32) {
    %c0_i32 = arith.constant 0 : i32
    %c0_i32_0 = arith.constant 0 : i32
    %c0_i32_1 = arith.constant 0 : i32
    %c0_i32_2 = arith.constant 0 : i32
    return %c0_i32, %c0_i32_0, %c0_i32_1 : i32, i32, i32
  }
  func.func @transform_6(%arg0: i32) -> (i32, i32) {
    %c0_i32 = arith.constant 0 : i32
    %c0_i32_0 = arith.constant 0 : i32
    %c0_i32_1 = arith.constant 0 : i32
    return %c0_i32, %c0_i32_0 : i32, i32
  }
  func.func @transform_7(%arg0: i32) -> (i32, i32) {
    %c0_i32 = arith.constant 0 : i32
    %c0_i32_0 = arith.constant 0 : i32
    %c0_i32_1 = arith.constant 0 : i32
    return %c0_i32, %c0_i32_0 : i32, i32
  }
  func.func @transform_8(%arg0: i32) -> (i32, i32) {
    %c0_i32 = arith.constant 0 : i32
    %c0_i32_0 = arith.constant 0 : i32
    %c0_i32_1 = arith.constant 0 : i32
    return %c0_i32, %c0_i32_0 : i32, i32
  }
  func.func @transform_9(%arg0: i32) -> (i32, i32) {
    %c0_i32 = arith.constant 0 : i32
    %c0_i32_0 = arith.constant 0 : i32
    return %arg0, %c0_i32 : i32, i32
  }
}

</mosaic_0001>

<llo_original>
// kernel: mcan_reid_forward.1
$region0: #{mcan_reid_forward.1}
  #allocation0 [shape = 'u32[]', space=smem, size = 0x4, offset = 0x4, fixed_abs, tag = 'smem constant byte address 0x4 - core index']
  #allocation1 [shape = 'u32[144,128]{1,0:T(1,128)}', space=vmem, size = 0x12000, scoped, tag = 'internal scratch']
  %s0 = inlined_call_operand.vmem [shape: bf16[2,4,256], index: 0, kind: input, shape index: {}]
  %s1 = inlined_call_operand.vmem [shape: bf16[2,4,256], index: 1, kind: input, shape index: {}]
  %s2 = inlined_call_operand.vmem [shape: bf16[4,32], index: 2, kind: input, shape index: {}]
  %s3 = inlined_call_operand.vmem [shape: f32[1,32], index: 3, kind: input, shape index: {}]
  %s4 = inlined_call_operand.vmem [shape: bf16[128,128], index: 4, kind: input, shape index: {}]
  %s5 = inlined_call_operand.vmem [shape: bf16[4,128,128], index: 5, kind: input, shape index: {}]
  %s6 = inlined_call_operand.vmem [shape: f32[8,128], index: 6, kind: input, shape index: {}]
  %s7 = inlined_call_operand.vmem [shape: bf16[128,128], index: 7, kind: input, shape index: {}]
  %s8 = inlined_call_operand.vmem [shape: f32[1,128], index: 8, kind: input, shape index: {}]
  %s9 = inlined_call_operand.vmem [shape: f32[8,128], index: 9, kind: output, shape index: {}]
  %s10 = sld [smem:[#allocation0]]
  $region46: #{mcan_reid_forward.1} parent=0
    _
  %s12 = ssub.s32 1, %s10
  %s13 = scalar_select 0, %s12, %s10
  // Predicated region
  $region2: #{mcan_reid_forward.1} parent=0 // pred_check
    _
  $region3: #{mcan_reid_forward.1} parent=0 // pred_check_branch
    %15 = sbr.rel (0) target = $region5
  $region4: #{mcan_reid_forward.1} parent=0 // pred_region
    _
  $region5: #{mcan_reid_forward.1} parent=0 // pred_fallthru
    _
  // Predicated region
  $region6: #{mcan_reid_forward.1} parent=0 // pred_check
    _
  $region7: #{mcan_reid_forward.1} parent=0 // pred_check_branch
    %17 = sbr.rel (0) target = $region9
  $region8: #{mcan_reid_forward.1} parent=0 // pred_region
    _
  $region9: #{mcan_reid_forward.1} parent=0 // pred_fallthru
    _
  // Predicated region
  $region10: #{mcan_reid_forward.1} parent=0 // pred_check
    _
  $region11: #{mcan_reid_forward.1} parent=0 // pred_check_branch
    %19 = sbr.rel (0) target = $region13
  $region12: #{mcan_reid_forward.1} parent=0 // pred_region
    _
  $region13: #{mcan_reid_forward.1} parent=0 // pred_fallthru
    _
  // Predicated region
  $region14: #{mcan_reid_forward.1} parent=0 // pred_check
    _
  $region15: #{mcan_reid_forward.1} parent=0 // pred_check_branch
    %21 = sbr.rel (0) target = $region17
  $region16: #{mcan_reid_forward.1} parent=0 // pred_region
    _
  $region17: #{mcan_reid_forward.1} parent=0 // pred_fallthru
    _
  // Predicated region
  $region18: #{mcan_reid_forward.1} parent=0 // pred_check
    _
  $region19: #{mcan_reid_forward.1} parent=0 // pred_check_branch
    %23 = sbr.rel (0) target = $region21
  $region20: #{mcan_reid_forward.1} parent=0 // pred_region
    _
  $region21: #{mcan_reid_forward.1} parent=0 // pred_fallthru
    _
  // Predicated region
  $region22: #{mcan_reid_forward.1} parent=0 // pred_check
    _
  $region23: #{mcan_reid_forward.1} parent=0 // pred_check_branch
    %25 = sbr.rel (0) target = $region25
  $region24: #{mcan_reid_forward.1} parent=0 // pred_region
    _
  $region25: #{mcan_reid_forward.1} parent=0 // pred_fallthru
    _
  // Predicated region
  $region26: #{mcan_reid_forward.1} parent=0 // pred_check
    _
  $region27: #{mcan_reid_forward.1} parent=0 // pred_check_branch
    %27 = sbr.rel (0) target = $region29
  $region28: #{mcan_reid_forward.1} parent=0 // pred_region
    _
  $region29: #{mcan_reid_forward.1} parent=0 // pred_fallthru
    _
  // Predicated region
  $region30: #{mcan_reid_forward.1} parent=0 // pred_check
    _
  $region31: #{mcan_reid_forward.1} parent=0 // pred_check_branch
    %29 = sbr.rel (0) target = $region33
  $region32: #{mcan_reid_forward.1} parent=0 // pred_region
    _
  $region33: #{mcan_reid_forward.1} parent=0 // pred_fallthru
    _
  // Predicated region
  $region34: #{mcan_reid_forward.1} parent=0 // pred_check
    _
  $region35: #{mcan_reid_forward.1} parent=0 // pred_check_branch
    %31 = sbr.rel (0) target = $region37
  $region36: #{mcan_reid_forward.1} parent=0 // pred_region
    _
  $region37: #{mcan_reid_forward.1} parent=0 // pred_fallthru
    _
  %v33 = vld [vmem:[%s0] sm:$0xf]
  %v34 = vld [vmem:[%s0 + $0x4] sm:$0xf]
  %v35 = vld [vmem:[%s0 + $0x8] sm:$0xf]
  %v36 = vld [vmem:[%s0 + $0xc] sm:$0xf]
  %v37 = vld [vmem:[%s0 + $0x10] sm:$0xf]
  %v38 = vld [vmem:[%s0 + $0x14] sm:$0xf]
  %v39 = vld [vmem:[%s0 + $0x18] sm:$0xf]
  %v40 = vld [vmem:[%s0 + $0x1c] sm:$0xf]
  %v41 = vunpack.c.l.bf16 %v33
  %v42 = vunpack.c.l.bf16 %v34
  %v43 = vunpack.c.l.bf16 %v35
  %v44 = vunpack.c.l.bf16 %v36
  %v45 = vunpack.c.l.bf16 %v37
  %v46 = vunpack.c.l.bf16 %v38
  %v47 = vunpack.c.l.bf16 %v39
  %v48 = vunpack.c.l.bf16 %v40
  %v57 = vcombine.high %v41, %v41
  %v58 = vcombine.high %v42, %v42
  %v59 = vcombine.high %v43, %v43
  %v60 = vcombine.high %v44, %v44
  %v61 = vcombine.high %v45, %v45
  %v62 = vcombine.high %v46, %v46
  %v63 = vcombine.high %v47, %v47
  %v64 = vcombine.high %v48, %v48
  %vm73 = vcmask 1043456
  %v74 = vsel %vm73, %v41, 0.0
  %v75 = vsel %vm73, %v57, 0.0
  %v76 = vadd.f32 %v74, %v75
  %77 = vadd.xlane.f32.xlu0 %v76
  %v78 = vpop.xlane.xlu0 %77
  %v79 = vsel %vm73, %v42, 0.0
  %v80 = vsel %vm73, %v58, 0.0
  %v81 = vadd.f32 %v79, %v80
  %82 = vadd.xlane.f32.xlu0 %v81
  %v83 = vpop.xlane.xlu0 %82
  %v84 = vsel %vm73, %v43, 0.0
  %v85 = vsel %vm73, %v59, 0.0
  %v86 = vadd.f32 %v84, %v85
  %87 = vadd.xlane.f32.xlu0 %v86
  %v88 = vpop.xlane.xlu0 %87
  %v89 = vsel %vm73, %v44, 0.0
  %v90 = vsel %vm73, %v60, 0.0
  %v91 = vadd.f32 %v89, %v90
  %92 = vadd.xlane.f32.xlu0 %v91
  %v93 = vpop.xlane.xlu0 %92
  %v94 = vsel %vm73, %v45, 0.0
  %v95 = vsel %vm73, %v61, 0.0
  %v96 = vadd.f32 %v94, %v95
  %97 = vadd.xlane.f32.xlu0 %v96
  %v98 = vpop.xlane.xlu0 %97
  %v99 = vsel %vm73, %v46, 0.0
  %v100 = vsel %vm73, %v62, 0.0
  %v101 = vadd.f32 %v99, %v100
  %102 = vadd.xlane.f32.xlu0 %v101
  %v103 = vpop.xlane.xlu0 %102
  %v104 = vsel %vm73, %v47, 0.0
  %v105 = vsel %vm73, %v63, 0.0
  %v106 = vadd.f32 %v104, %v105
  %107 = vadd.xlane.f32.xlu0 %v106
  %v108 = vpop.xlane.xlu0 %107
  %v109 = vsel %vm73, %v48, 0.0
  %v110 = vsel %vm73, %v64, 0.0
  %v111 = vadd.f32 %v109, %v110
  %112 = vadd.xlane.f32.xlu0 %v111
  %v113 = vpop.xlane.xlu0 %112
  %v114 = vrcp.pop 256.0
  %v115 = vmul.f32 %v78, %v114
  %v116 = vmul.f32 %v83, %v114
  %v117 = vmul.f32 %v88, %v114
  %v118 = vmul.f32 %v93, %v114
  %v119 = vmul.f32 %v98, %v114
  %v120 = vmul.f32 %v103, %v114
  %v121 = vmul.f32 %v108, %v114
  %v122 = vmul.f32 %v113, %v114
  %v123 = vld [vmem:[%s1] sm:$0xf]
  %v124 = vld [vmem:[%s1 + $0x4] sm:$0xf]
  %v125 = vld [vmem:[%s1 + $0x8] sm:$0xf]
  %v126 = vld [vmem:[%s1 + $0xc] sm:$0xf]
  %v127 = vld [vmem:[%s1 + $0x10] sm:$0xf]
  %v128 = vld [vmem:[%s1 + $0x14] sm:$0xf]
  %v129 = vld [vmem:[%s1 + $0x18] sm:$0xf]
  %v130 = vld [vmem:[%s1 + $0x1c] sm:$0xf]
  %v131 = vunpack.c.l.bf16 %v123
  %v132 = vunpack.c.l.bf16 %v124
  %v133 = vunpack.c.l.bf16 %v125
  %v134 = vunpack.c.l.bf16 %v126
  %v135 = vunpack.c.l.bf16 %v127
  %v136 = vunpack.c.l.bf16 %v128
  %v137 = vunpack.c.l.bf16 %v129
  %v138 = vunpack.c.l.bf16 %v130
  %v147 = vcombine.high %v131, %v131
  %v148 = vcombine.high %v132, %v132
  %v149 = vcombine.high %v133, %v133
  %v150 = vcombine.high %v134, %v134
  %v151 = vcombine.high %v135, %v135
  %v152 = vcombine.high %v136, %v136
  %v153 = vcombine.high %v137, %v137
  %v154 = vcombine.high %v138, %v138
  %v163 = vsel %vm73, %v131, 0.0
  %v164 = vsel %vm73, %v147, 0.0
  %v165 = vadd.f32 %v163, %v164
  %166 = vadd.xlane.f32.xlu0 %v165
  %v167 = vpop.xlane.xlu0 %166
  %v168 = vsel %vm73, %v132, 0.0
  %v169 = vsel %vm73, %v148, 0.0
  %v170 = vadd.f32 %v168, %v169
  %171 = vadd.xlane.f32.xlu0 %v170
  %v172 = vpop.xlane.xlu0 %171
  %v173 = vsel %vm73, %v133, 0.0
  %v174 = vsel %vm73, %v149, 0.0
  %v175 = vadd.f32 %v173, %v174
  %176 = vadd.xlane.f32.xlu0 %v175
  %v177 = vpop.xlane.xlu0 %176
  %v178 = vsel %vm73, %v134, 0.0
  %v179 = vsel %vm73, %v150, 0.0
  %v180 = vadd.f32 %v178, %v179
  %181 = vadd.xlane.f32.xlu0 %v180
  %v182 = vpop.xlane.xlu0 %181
  %v183 = vsel %vm73, %v135, 0.0
  %v184 = vsel %vm73, %v151, 0.0
  %v185 = vadd.f32 %v183, %v184
  %186 = vadd.xlane.f32.xlu0 %v185
  %v187 = vpop.xlane.xlu0 %186
  %v188 = vsel %vm73, %v136, 0.0
  %v189 = vsel %vm73, %v152, 0.0
  %v190 = vadd.f32 %v188, %v189
  %191 = vadd.xlane.f32.xlu0 %v190
  %v192 = vpop.xlane.xlu0 %191
  %v193 = vsel %vm73, %v137, 0.0
  %v194 = vsel %vm73, %v153, 0.0
  %v195 = vadd.f32 %v193, %v194
  %196 = vadd.xlane.f32.xlu0 %v195
  %v197 = vpop.xlane.xlu0 %196
  %v198 = vsel %vm73, %v138, 0.0
  %v199 = vsel %vm73, %v154, 0.0
  %v200 = vadd.f32 %v198, %v199
  %201 = vadd.xlane.f32.xlu0 %v200
  %v202 = vpop.xlane.xlu0 %201
  %v203 = vmul.f32 %v167, %v114
  %v204 = vmul.f32 %v172, %v114
  %v205 = vmul.f32 %v177, %v114
  %v206 = vmul.f32 %v182, %v114
  %v207 = vmul.f32 %v187, %v114
  %v208 = vmul.f32 %v192, %v114
  %v209 = vmul.f32 %v197, %v114
  %v210 = vmul.f32 %v202, %v114
  %v211 = vld [vmem:[%s2] sm:$0x3]
  %v212 = vld [vmem:[%s3] sm:$0x1]
  %v213 = vpack.c.bf16 %v115, %v115
  %v214 = vpack.c.bf16 %v116, %v116
  %v215 = vpack.c.bf16 %v117, %v117
  %v216 = vpack.c.bf16 %v118, %v118
  %v217 = vpack.c.bf16 %v119, %v119
  %v218 = vpack.c.bf16 %v120, %v120
  %v219 = vpack.c.bf16 %v121, %v121
  %v220 = vpack.c.bf16 %v122, %v122
  %v222 = vlaneseq
  %v223 = vshrl.u32 %v222, 7
  %v224 = vsub.s32 0, %v223
  %v225 = vrot.slane %v212, %v224
  %v235 = vunpack.c.l.b16 %v213
  %v236 = vunpack.c.l.b16 %v214
  %v237 = vunpack.c.l.b16 %v215
  %v238 = vunpack.c.l.b16 %v216
  %v239 = vunpack.c.l.b16 %v217
  %v240 = vunpack.c.l.b16 %v218
  %v241 = vunpack.c.l.b16 %v219
  %v242 = vunpack.c.l.b16 %v220
  %v243 = vlaneseq
  %v244 = vand.u32 %v243, 127
  %v245 = vlaneseq
  %v246 = vshrl.u32 %v245, 7
  %v247 = vsub.s32 %v244, %v246
  %v248 = vrot.slane %v235, %v247
  %v249 = vlaneseq
  %v250 = vshrl.u32 %v249, 7
  %v251 = vsub.s32 %v244, %v250
  %v252 = vrot.slane %v236, %v251
  %v253 = vlaneseq
  %v254 = vshrl.u32 %v253, 7
  %v255 = vsub.s32 %v244, %v254
  %v256 = vrot.slane %v237, %v255
  %v257 = vlaneseq
  %v258 = vshrl.u32 %v257, 7
  %v259 = vsub.s32 %v244, %v258
  %v260 = vrot.slane %v238, %v259
  %v261 = vlaneseq
  %v262 = vshrl.u32 %v261, 7
  %v263 = vsub.s32 %v244, %v262
  %v264 = vrot.slane %v239, %v263
  %v265 = vlaneseq
  %v266 = vshrl.u32 %v265, 7
  %v267 = vsub.s32 %v244, %v266
  %v268 = vrot.slane %v240, %v267
  %v269 = vlaneseq
  %v270 = vshrl.u32 %v269, 7
  %v271 = vsub.s32 %v244, %v270
  %v272 = vrot.slane %v241, %v271
  %v273 = vlaneseq
  %v274 = vshrl.u32 %v273, 7
  %v275 = vsub.s32 %v244, %v274
  %v276 = vrot.slane %v242, %v275
  %vm277 = vcmask 1041409
  %v278 = vsel %vm277, %v252, %v248
  %vm279 = vcmask 1042434
  %v280 = vsel %vm279, %v256, %v278
  %vm281 = vcmask 1043459
  %v282 = vsel %vm281, %v260, %v280
  %vm283 = vcmask 1044484
  %v284 = vsel %vm283, %v264, %v282
  %vm285 = vcmask 1045509
  %v286 = vsel %vm285, %v268, %v284
  %vm287 = vcmask 1046534
  %v288 = vsel %vm287, %v272, %v286
  %vm289 = vcmask 1047559
  %v290 = vsel %vm289, %v276, %v288
  %v291 = vpack.c.b16 %v290, %v290
  %vm292 = vcmask 31744
  %v294 = vsel %vm292, %v291, 0
  %vm296 = vcmask 1041408
  %v298 = vsel %vm296, %v211, 0
  %300 = vmatprep.subr.bf16.mxu0 0
  %301 = vmatpush1.bf16.msra.mxu0 %v298
  %302 = vmatprep.subr.bf16.mxu0 0
  %303 = vmatpush1.bf16.msra.mxu0 0
  %304 = vmatprep.subr.bf16.mxu0 0
  %305 = vmatpush1.bf16.msra.mxu0 0
  %306 = vmatprep.subr.bf16.mxu0 0
  %307 = vmatpush1.bf16.msra.mxu0 0
  %308 = vmatprep.subr.bf16.mxu0 0
  %309 = vmatpush1.bf16.msra.mxu0 0
  %310 = vmatprep.subr.bf16.mxu0 0
  %311 = vmatpush1.bf16.msra.mxu0 0
  %312 = vmatprep.subr.bf16.mxu0 0
  %313 = vmatpush1.bf16.msra.mxu0 0
  %314 = vmatprep.subr.bf16.mxu0 0
  %315 = vmatpush1.bf16.msra.mxu0 0
  %316 = vmatprep.subr.bf16.mxu0 0
  %317 = vmatpush1.bf16.msra.mxu0 0
  %318 = vmatprep.subr.bf16.mxu0 0
  %319 = vmatpush1.bf16.msra.mxu0 0
  %320 = vmatprep.subr.bf16.mxu0 0
  %321 = vmatpush1.bf16.msra.mxu0 0
  %322 = vmatprep.subr.bf16.mxu0 0
  %323 = vmatpush1.bf16.msra.mxu0 0
  %324 = vmatprep.subr.bf16.mxu0 0
  %325 = vmatpush1.bf16.msra.mxu0 0
  %326 = vmatprep.subr.bf16.mxu0 0
  %327 = vmatpush1.bf16.msra.mxu0 0
  %328 = vmatprep.subr.bf16.mxu0 0
  %329 = vmatpush1.bf16.msra.mxu0 0
  %330 = vmatprep.subr.bf16.mxu0 0
  %331 = vmatpush1.bf16.msra.mxu0 0
  %332 = vmatprep.mubr.bf16.mxu0 0
  %333 = vmatmul.mubr.bf16.gmra.mrb[0].mxu0 %v294
  %v334 = vpop.f32.mrb[0].mxu0
  %v335 = vadd.f32 %v225, %v334
  %v336 = vpop.f32.mrb[0].mxu0
  %v337 = vpop.f32.mrb[0].mxu0
  %v338 = vpop.f32.mrb[0].mxu0
  %339 = vdwg.mxu0
  %v340 = vpack.c.bf16 %v203, %v203
  %v341 = vpack.c.bf16 %v204, %v204
  %v342 = vpack.c.bf16 %v205, %v205
  %v343 = vpack.c.bf16 %v206, %v206
  %v344 = vpack.c.bf16 %v207, %v207
  %v345 = vpack.c.bf16 %v208, %v208
  %v346 = vpack.c.bf16 %v209, %v209
  %v347 = vpack.c.bf16 %v210, %v210
  %v356 = vunpack.c.l.b16 %v340
  %v357 = vunpack.c.l.b16 %v341
  %v358 = vunpack.c.l.b16 %v342
  %v359 = vunpack.c.l.b16 %v343
  %v360 = vunpack.c.l.b16 %v344
  %v361 = vunpack.c.l.b16 %v345
  %v362 = vunpack.c.l.b16 %v346
  %v363 = vunpack.c.l.b16 %v347
  %v364 = vlaneseq
  %v365 = vshrl.u32 %v364, 7
  %v366 = vsub.s32 %v244, %v365
  %v367 = vrot.slane %v356, %v366
  %v368 = vlaneseq
  %v369 = vshrl.u32 %v368, 7
  %v370 = vsub.s32 %v244, %v369
  %v371 = vrot.slane %v357, %v370
  %v372 = vlaneseq
  %v373 = vshrl.u32 %v372, 7
  %v374 = vsub.s32 %v244, %v373
  %v375 = vrot.slane %v358, %v374
  %v376 = vlaneseq
  %v377 = vshrl.u32 %v376, 7
  %v378 = vsub.s32 %v244, %v377
  %v379 = vrot.slane %v359, %v378
  %v380 = vlaneseq
  %v381 = vshrl.u32 %v380, 7
  %v382 = vsub.s32 %v244, %v381
  %v383 = vrot.slane %v360, %v382
  %v384 = vlaneseq
  %v385 = vshrl.u32 %v384, 7
  %v386 = vsub.s32 %v244, %v385
  %v387 = vrot.slane %v361, %v386
  %v388 = vlaneseq
  %v389 = vshrl.u32 %v388, 7
  %v390 = vsub.s32 %v244, %v389
  %v391 = vrot.slane %v362, %v390
  %v392 = vlaneseq
  %v393 = vshrl.u32 %v392, 7
  %v394 = vsub.s32 %v244, %v393
  %v395 = vrot.slane %v363, %v394
  %v396 = vsel %vm277, %v371, %v367
  %v397 = vsel %vm279, %v375, %v396
  %v398 = vsel %vm281, %v379, %v397
  %v399 = vsel %vm283, %v383, %v398
  %v400 = vsel %vm285, %v387, %v399
  %v401 = vsel %vm287, %v391, %v400
  %v402 = vsel %vm289, %v395, %v401
  %v403 = vpack.c.b16 %v402, %v402
  %v405 = vsel %vm292, %v403, 0
  %407 = vmatprep.subr.bf16.mxu0 0
  %408 = vmatpush1.bf16.msra.mxu0 %v298
  %409 = vmatprep.subr.bf16.mxu0 0
  %410 = vmatpush1.bf16.msra.mxu0 0
  %411 = vmatprep.subr.bf16.mxu0 0
  %412 = vmatpush1.bf16.msra.mxu0 0
  %413 = vmatprep.subr.bf16.mxu0 0
  %414 = vmatpush1.bf16.msra.mxu0 0
  %415 = vmatprep.subr.bf16.mxu0 0
  %416 = vmatpush1.bf16.msra.mxu0 0
  %417 = vmatprep.subr.bf16.mxu0 0
  %418 = vmatpush1.bf16.msra.mxu0 0
  %419 = vmatprep.subr.bf16.mxu0 0
  %420 = vmatpush1.bf16.msra.mxu0 0
  %421 = vmatprep.subr.bf16.mxu0 0
  %422 = vmatpush1.bf16.msra.mxu0 0
  %423 = vmatprep.subr.bf16.mxu0 0
  %424 = vmatpush1.bf16.msra.mxu0 0
  %425 = vmatprep.subr.bf16.mxu0 0
  %426 = vmatpush1.bf16.msra.mxu0 0
  %427 = vmatprep.subr.bf16.mxu0 0
  %428 = vmatpush1.bf16.msra.mxu0 0
  %429 = vmatprep.subr.bf16.mxu0 0
  %430 = vmatpush1.bf16.msra.mxu0 0
  %431 = vmatprep.subr.bf16.mxu0 0
  %432 = vmatpush1.bf16.msra.mxu0 0
  %433 = vmatprep.subr.bf16.mxu0 0
  %434 = vmatpush1.bf16.msra.mxu0 0
  %435 = vmatprep.subr.bf16.mxu0 0
  %436 = vmatpush1.bf16.msra.mxu0 0
  %437 = vmatprep.subr.bf16.mxu0 0
  %438 = vmatpush1.bf16.msra.mxu0 0
  %439 = vmatprep.mubr.bf16.mxu0 0
  %440 = vmatmul.mubr.bf16.gmra.mrb[0].mxu0 %v405
  %v441 = vpop.f32.mrb[0].mxu0
  %v442 = vadd.f32 %v225, %v441
  %v443 = vpop.f32.mrb[0].mxu0
  %v444 = vpop.f32.mrb[0].mxu0
  %v445 = vpop.f32.mrb[0].mxu0
  %446 = vdwg.mxu0
  %v447 = vld [vmem:[%s6] sm:$0xff]
  %v448 = vmul.f32 %v335, %v442
  %v449 = vsub.f32 %v335, %v442
  %451 = vrot.lane.b32.xlu0 %v442, 32
  %v452 = vpop.permute.xlu0 %451
  %455 = vrot.lane.b32.xlu0 %v448, 64
  %v456 = vpop.permute.xlu0 %455
  %459 = vrot.lane.b32.xlu0 %v449, 96
  %v460 = vpop.permute.xlu0 %459
  %vm462 = vcmask 261120
  %v463 = vsel %vm462, %v335, %v452
  %vm464 = vcmask 523264
  %v465 = vsel %vm464, %v463, %v456
  %vm466 = vcmask 785408
  %v467 = vsel %vm466, %v465, %v460
  %v468 = vpack.c.bf16 %v467, %v467
  %v469 = vld [vmem:[%s4] sm:$0xf]
  %v470 = vld [vmem:[%s4 + $0x4] sm:$0xf]
  %v471 = vld [vmem:[%s4 + $0x8] sm:$0xf]
  %v472 = vld [vmem:[%s4 + $0xc] sm:$0xf]
  %v473 = vld [vmem:[%s4 + $0x10] sm:$0xf]
  %v474 = vld [vmem:[%s4 + $0x14] sm:$0xf]
  %v475 = vld [vmem:[%s4 + $0x18] sm:$0xf]
  %v476 = vld [vmem:[%s4 + $0x1c] sm:$0xf]
  %v477 = vld [vmem:[%s4 + $0x20] sm:$0xf]
  %v478 = vld [vmem:[%s4 + $0x24] sm:$0xf]
  %v479 = vld [vmem:[%s4 + $0x28] sm:$0xf]
  %v480 = vld [vmem:[%s4 + $0x2c] sm:$0xf]
  %v481 = vld [vmem:[%s4 + $0x30] sm:$0xf]
  %v482 = vld [vmem:[%s4 + $0x34] sm:$0xf]
  %v483 = vld [vmem:[%s4 + $0x38] sm:$0xf]
  %v484 = vld [vmem:[%s4 + $0x3c] sm:$0xf]
  %v485 = vlaneseq
  %v486 = vshrl.u32 %v485, 7
  %v487 = vsub.s32 0, %v486
  %v488 = vrot.slane %v447, %v487
  %v505 = vunpack.c.l.b16 %v469
  %v506 = vunpack.c.l.b16 %v470
  %v507 = vunpack.c.l.b16 %v471
  %v508 = vunpack.c.l.b16 %v472
  %v509 = vunpack.c.l.b16 %v473
  %v510 = vunpack.c.l.b16 %v474
  %v511 = vunpack.c.l.b16 %v475
  %v512 = vunpack.c.l.b16 %v476
  %v513 = vunpack.c.l.b16 %v477
  %v514 = vunpack.c.l.b16 %v478
  %v515 = vunpack.c.l.b16 %v479
  %v516 = vunpack.c.l.b16 %v480
  %v517 = vunpack.c.l.b16 %v481
  %v518 = vunpack.c.l.b16 %v482
  %v519 = vunpack.c.l.b16 %v483
  %v520 = vunpack.c.l.b16 %v484
  %v521 = vpack.c.b16 %v506, %v505
  %v522 = vpack.c.b16 %v508, %v507
  %v523 = vpack.c.b16 %v510, %v509
  %v524 = vpack.c.b16 %v512, %v511
  %v525 = vpack.c.b16 %v514, %v513
  %v526 = vpack.c.b16 %v516, %v515
  %v527 = vpack.c.b16 %v518, %v517
  %v528 = vpack.c.b16 %v520, %v519
  %537 = vmatprep.subr.bf16.mxu0 0
  %538 = vmatpush1.bf16.msra.mxu0 %v521
  %539 = vmatprep.subr.bf16.mxu0 0
  %540 = vmatpush1.bf16.msra.mxu0 %v522
  %541 = vmatprep.subr.bf16.mxu0 0
  %542 = vmatpush1.bf16.msra.mxu0 %v523
  %543 = vmatprep.subr.bf16.mxu0 0
  %544 = vmatpush1.bf16.msra.mxu0 %v524
  %545 = vmatprep.subr.bf16.mxu0 0
  %546 = vmatpush1.bf16.msra.mxu0 %v525
  %547 = vmatprep.subr.bf16.mxu0 0
  %548 = vmatpush1.bf16.msra.mxu0 %v526
  %549 = vmatprep.subr.bf16.mxu0 0
  %550 = vmatpush1.bf16.msra.mxu0 %v527
  %551 = vmatprep.subr.bf16.mxu0 0
  %552 = vmatpush1.bf16.msra.mxu0 %v528
  %553 = vmatprep.subr.bf16.mxu0 0
  %554 = vmatpush1.bf16.msra.mxu0 0
  %555 = vmatprep.subr.bf16.mxu0 0
  %556 = vmatpush1.bf16.msra.mxu0 0
  %557 = vmatprep.subr.bf16.mxu0 0
  %558 = vmatpush1.bf16.msra.mxu0 0
  %559 = vmatprep.subr.bf16.mxu0 0
  %560 = vmatpush1.bf16.msra.mxu0 0
  %561 = vmatprep.subr.bf16.mxu0 0
  %562 = vmatpush1.bf16.msra.mxu0 0
  %563 = vmatprep.subr.bf16.mxu0 0
  %564 = vmatpush1.bf16.msra.mxu0 0
  %565 = vmatprep.subr.bf16.mxu0 0
  %566 = vmatpush1.bf16.msra.mxu0 0
  %567 = vmatprep.subr.bf16.mxu0 0
  %568 = vmatpush1.bf16.msra.mxu0 0
  %569 = vmatprep.mubr.bf16.mxu0 0
  %570 = vmatmul.mubr.bf16.gmra.mrb[0].mxu0 %v468
  %v571 = vpop.f32.mrb[0].mxu0
  %v572 = vadd.f32 %v488, %v571
  %v573 = vpop.f32.mrb[0].mxu0
  %v574 = vpop.f32.mrb[0].mxu0
  %v575 = vpop.f32.mrb[0].mxu0
  %576 = vdwg.mxu0
  %v577 = vld [vmem:[%s5] sm:$0xf]
  %v578 = vld [vmem:[%s5 + $0x4] sm:$0xf]
  %v579 = vld [vmem:[%s5 + $0x8] sm:$0xf]
  %v580 = vld [vmem:[%s5 + $0xc] sm:$0xf]
  %v581 = vld [vmem:[%s5 + $0x10] sm:$0xf]
  %v582 = vld [vmem:[%s5 + $0x14] sm:$0xf]
  %v583 = vld [vmem:[%s5 + $0x18] sm:$0xf]
  %v584 = vld [vmem:[%s5 + $0x1c] sm:$0xf]
  %v585 = vld [vmem:[%s5 + $0x20] sm:$0xf]
  %v586 = vld [vmem:[%s5 + $0x24] sm:$0xf]
  %v587 = vld [vmem:[%s5 + $0x28] sm:$0xf]
  %v588 = vld [vmem:[%s5 + $0x2c] sm:$0xf]
  %v589 = vld [vmem:[%s5 + $0x30] sm:$0xf]
  %v590 = vld [vmem:[%s5 + $0x34] sm:$0xf]
  %v591 = vld [vmem:[%s5 + $0x38] sm:$0xf]
  %v592 = vld [vmem:[%s5 + $0x3c] sm:$0xf]
  %s593 = scalar_lea.vmem %s5, 64
  %v594 = vld [vmem:[%s593] sm:$0xf]
  %v595 = vld [vmem:[%s593 + $0x4] sm:$0xf]
  %v596 = vld [vmem:[%s593 + $0x8] sm:$0xf]
  %v597 = vld [vmem:[%s593 + $0xc] sm:$0xf]
  %v598 = vld [vmem:[%s593 + $0x10] sm:$0xf]
  %v599 = vld [vmem:[%s593 + $0x14] sm:$0xf]
  %v600 = vld [vmem:[%s593 + $0x18] sm:$0xf]
  %v601 = vld [vmem:[%s593 + $0x1c] sm:$0xf]
  %v602 = vld [vmem:[%s593 + $0x20] sm:$0xf]
  %v603 = vld [vmem:[%s593 + $0x24] sm:$0xf]
  %v604 = vld [vmem:[%s593 + $0x28] sm:$0xf]
  %v605 = vld [vmem:[%s593 + $0x2c] sm:$0xf]
  %v606 = vld [vmem:[%s593 + $0x30] sm:$0xf]
  %v607 = vld [vmem:[%s593 + $0x34] sm:$0xf]
  %v608 = vld [vmem:[%s593 + $0x38] sm:$0xf]
  %v609 = vld [vmem:[%s593 + $0x3c] sm:$0xf]
  %v610 = vpack.c.bf16 %v572, %v572
  %v611 = vlaneseq
  %v612 = vshrl.u32 %v611, 7
  %v613 = vsub.s32 1, %v612
  %v614 = vrot.slane %v447, %v613
  %v631 = vunpack.c.l.b16 %v577
  %v632 = vunpack.c.l.b16 %v578
  %v633 = vunpack.c.l.b16 %v579
  %v634 = vunpack.c.l.b16 %v580
  %v635 = vunpack.c.l.b16 %v581
  %v636 = vunpack.c.l.b16 %v582
  %v637 = vunpack.c.l.b16 %v583
  %v638 = vunpack.c.l.b16 %v584
  %v639 = vunpack.c.l.b16 %v585
  %v640 = vunpack.c.l.b16 %v586
  %v641 = vunpack.c.l.b16 %v587
  %v642 = vunpack.c.l.b16 %v588
  %v643 = vunpack.c.l.b16 %v589
  %v644 = vunpack.c.l.b16 %v590
  %v645 = vunpack.c.l.b16 %v591
  %v646 = vunpack.c.l.b16 %v592
  %v647 = vpack.c.b16 %v632, %v631
  %v648 = vpack.c.b16 %v634, %v633
  %v649 = vpack.c.b16 %v636, %v635
  %v650 = vpack.c.b16 %v638, %v637
  %v651 = vpack.c.b16 %v640, %v639
  %v652 = vpack.c.b16 %v642, %v641
  %v653 = vpack.c.b16 %v644, %v643
  %v654 = vpack.c.b16 %v646, %v645
  %663 = vmatprep.subr.bf16.mxu0 0
  %664 = vmatpush1.bf16.msra.mxu0 %v647
  %665 = vmatprep.subr.bf16.mxu0 0
  %666 = vmatpush1.bf16.msra.mxu0 %v648
  %667 = vmatprep.subr.bf16.mxu0 0
  %668 = vmatpush1.bf16.msra.mxu0 %v649
  %669 = vmatprep.subr.bf16.mxu0 0
  %670 = vmatpush1.bf16.msra.mxu0 %v650
  %671 = vmatprep.subr.bf16.mxu0 0
  %672 = vmatpush1.bf16.msra.mxu0 %v651
  %673 = vmatprep.subr.bf16.mxu0 0
  %674 = vmatpush1.bf16.msra.mxu0 %v652
  %675 = vmatprep.subr.bf16.mxu0 0
  %676 = vmatpush1.bf16.msra.mxu0 %v653
  %677 = vmatprep.subr.bf16.mxu0 0
  %678 = vmatpush1.bf16.msra.mxu0 %v654
  %679 = vmatprep.subr.bf16.mxu0 0
  %680 = vmatpush1.bf16.msra.mxu0 0
  %681 = vmatprep.subr.bf16.mxu0 0
  %682 = vmatpush1.bf16.msra.mxu0 0
  %683 = vmatprep.subr.bf16.mxu0 0
  %684 = vmatpush1.bf16.msra.mxu0 0
  %685 = vmatprep.subr.bf16.mxu0 0
  %686 = vmatpush1.bf16.msra.mxu0 0
  %687 = vmatprep.subr.bf16.mxu0 0
  %688 = vmatpush1.bf16.msra.mxu0 0
  %689 = vmatprep.subr.bf16.mxu0 0
  %690 = vmatpush1.bf16.msra.mxu0 0
  %691 = vmatprep.subr.bf16.mxu0 0
  %692 = vmatpush1.bf16.msra.mxu0 0
  %693 = vmatprep.subr.bf16.mxu0 0
  %694 = vmatpush1.bf16.msra.mxu0 0
  %695 = vmatprep.mubr.bf16.mxu0 0
  %696 = vmatmul.mubr.bf16.gmra.mrb[0].mxu0 %v610
  %v697 = vpop.f32.mrb[0].mxu0
  %v698 = vadd.f32 %v614, %v697
  %v699 = vpop.f32.mrb[0].mxu0
  %v700 = vpop.f32.mrb[0].mxu0
  %v701 = vpop.f32.mrb[0].mxu0
  %702 = vdwg.mxu0
  %v703 = vmax.f32 %v698, 0.0
  %v704 = vlaneseq
  %v705 = vshrl.u32 %v704, 7
  %v706 = vsub.s32 2, %v705
  %v707 = vrot.slane %v447, %v706
  %v724 = vunpack.c.l.b16 %v594
  %v725 = vunpack.c.l.b16 %v595
  %v726 = vunpack.c.l.b16 %v596
  %v727 = vunpack.c.l.b16 %v597
  %v728 = vunpack.c.l.b16 %v598
  %v729 = vunpack.c.l.b16 %v599
  %v730 = vunpack.c.l.b16 %v600
  %v731 = vunpack.c.l.b16 %v601
  %v732 = vunpack.c.l.b16 %v602
  %v733 = vunpack.c.l.b16 %v603
  %v734 = vunpack.c.l.b16 %v604
  %v735 = vunpack.c.l.b16 %v605
  %v736 = vunpack.c.l.b16 %v606
  %v737 = vunpack.c.l.b16 %v607
  %v738 = vunpack.c.l.b16 %v608
  %v739 = vunpack.c.l.b16 %v609
  %v740 = vpack.c.b16 %v725, %v724
  %v741 = vpack.c.b16 %v727, %v726
  %v742 = vpack.c.b16 %v729, %v728
  %v743 = vpack.c.b16 %v731, %v730
  %v744 = vpack.c.b16 %v733, %v732
  %v745 = vpack.c.b16 %v735, %v734
  %v746 = vpack.c.b16 %v737, %v736
  %v747 = vpack.c.b16 %v739, %v738
  %756 = vmatprep.subr.bf16.mxu0 0
  %757 = vmatpush1.bf16.msra.mxu0 %v740
  %758 = vmatprep.subr.bf16.mxu0 0
  %759 = vmatpush1.bf16.msra.mxu0 %v741
  %760 = vmatprep.subr.bf16.mxu0 0
  %761 = vmatpush1.bf16.msra.mxu0 %v742
  %762 = vmatprep.subr.bf16.mxu0 0
  %763 = vmatpush1.bf16.msra.mxu0 %v743
  %764 = vmatprep.subr.bf16.mxu0 0
  %765 = vmatpush1.bf16.msra.mxu0 %v744
  %766 = vmatprep.subr.bf16.mxu0 0
  %767 = vmatpush1.bf16.msra.mxu0 %v745
  %768 = vmatprep.subr.bf16.mxu0 0
  %769 = vmatpush1.bf16.msra.mxu0 %v746
  %770 = vmatprep.subr.bf16.mxu0 0
  %771 = vmatpush1.bf16.msra.mxu0 %v747
  %772 = vmatprep.subr.bf16.mxu0 0
  %773 = vmatpush1.bf16.msra.mxu0 0
  %774 = vmatprep.subr.bf16.mxu0 0
  %775 = vmatpush1.bf16.msra.mxu0 0
  %776 = vmatprep.subr.bf16.mxu0 0
  %777 = vmatpush1.bf16.msra.mxu0 0
  %778 = vmatprep.subr.bf16.mxu0 0
  %779 = vmatpush1.bf16.msra.mxu0 0
  %780 = vmatprep.subr.bf16.mxu0 0
  %781 = vmatpush1.bf16.msra.mxu0 0
  %782 = vmatprep.subr.bf16.mxu0 0
  %783 = vmatpush1.bf16.msra.mxu0 0
  %784 = vmatprep.subr.bf16.mxu0 0
  %785 = vmatpush1.bf16.msra.mxu0 0
  %786 = vmatprep.subr.bf16.mxu0 0
  %787 = vmatpush1.bf16.msra.mxu0 0
  %788 = vmatprep.mubr.bf16.mxu0 0
  %789 = vmatmul.mubr.bf16.gmra.mrb[0].mxu0 %v610
  %v790 = vpop.f32.mrb[0].mxu0
  %v791 = vadd.f32 %v707, %v790
  %v792 = vpop.f32.mrb[0].mxu0
  %v793 = vpop.f32.mrb[0].mxu0
  %v794 = vpop.f32.mrb[0].mxu0
  %795 = vdwg.mxu0
  %v796 = vxor.u32 %v791, 2147483648
  %v797 = vmul.f32 %v796, 1.442695
  %v798 = vpow.pop %v797
  %v799 = vadd.f32 %v798, 1.0
  %v800 = vrcp.pop %v799
  %v801 = vmul.f32 1.0, %v800
  %v802 = vmul.f32 %v801, %v703
  %v803 = vsub.f32 1.0, %v801
  %v804 = vmul.f32 %v803, %v572
  %v805 = vadd.f32 %v802, %v804
  %s806 = scalar_lea.vmem %s5, 128
  %v807 = vld [vmem:[%s806] sm:$0xf]
  %v808 = vld [vmem:[%s806 + $0x4] sm:$0xf]
  %v809 = vld [vmem:[%s806 + $0x8] sm:$0xf]
  %v810 = vld [vmem:[%s806 + $0xc] sm:$0xf]
  %v811 = vld [vmem:[%s806 + $0x10] sm:$0xf]
  %v812 = vld [vmem:[%s806 + $0x14] sm:$0xf]
  %v813 = vld [vmem:[%s806 + $0x18] sm:$0xf]
  %v814 = vld [vmem:[%s806 + $0x1c] sm:$0xf]
  %v815 = vld [vmem:[%s806 + $0x20] sm:$0xf]
  %v816 = vld [vmem:[%s806 + $0x24] sm:$0xf]
  %v817 = vld [vmem:[%s806 + $0x28] sm:$0xf]
  %v818 = vld [vmem:[%s806 + $0x2c] sm:$0xf]
  %v819 = vld [vmem:[%s806 + $0x30] sm:$0xf]
  %v820 = vld [vmem:[%s806 + $0x34] sm:$0xf]
  %v821 = vld [vmem:[%s806 + $0x38] sm:$0xf]
  %v822 = vld [vmem:[%s806 + $0x3c] sm:$0xf]
  %s823 = scalar_lea.vmem %s5, 192
  %v824 = vld [vmem:[%s823] sm:$0xf]
  %v825 = vld [vmem:[%s823 + $0x4] sm:$0xf]
  %v826 = vld [vmem:[%s823 + $0x8] sm:$0xf]
  %v827 = vld [vmem:[%s823 + $0xc] sm:$0xf]
  %v828 = vld [vmem:[%s823 + $0x10] sm:$0xf]
  %v829 = vld [vmem:[%s823 + $0x14] sm:$0xf]
  %v830 = vld [vmem:[%s823 + $0x18] sm:$0xf]
  %v831 = vld [vmem:[%s823 + $0x1c] sm:$0xf]
  %v832 = vld [vmem:[%s823 + $0x20] sm:$0xf]
  %v833 = vld [vmem:[%s823 + $0x24] sm:$0xf]
  %v834 = vld [vmem:[%s823 + $0x28] sm:$0xf]
  %v835 = vld [vmem:[%s823 + $0x2c] sm:$0xf]
  %v836 = vld [vmem:[%s823 + $0x30] sm:$0xf]
  %v837 = vld [vmem:[%s823 + $0x34] sm:$0xf]
  %v838 = vld [vmem:[%s823 + $0x38] sm:$0xf]
  %v839 = vld [vmem:[%s823 + $0x3c] sm:$0xf]
  %v840 = vpack.c.bf16 %v805, %v805
  %v841 = vlaneseq
  %v842 = vshrl.u32 %v841, 7
  %v843 = vsub.s32 3, %v842
  %v844 = vrot.slane %v447, %v843
  %v861 = vunpack.c.l.b16 %v807
  %v862 = vunpack.c.l.b16 %v808
  %v863 = vunpack.c.l.b16 %v809
  %v864 = vunpack.c.l.b16 %v810
  %v865 = vunpack.c.l.b16 %v811
  %v866 = vunpack.c.l.b16 %v812
  %v867 = vunpack.c.l.b16 %v813
  %v868 = vunpack.c.l.b16 %v814
  %v869 = vunpack.c.l.b16 %v815
  %v870 = vunpack.c.l.b16 %v816
  %v871 = vunpack.c.l.b16 %v817
  %v872 = vunpack.c.l.b16 %v818
  %v873 = vunpack.c.l.b16 %v819
  %v874 = vunpack.c.l.b16 %v820
  %v875 = vunpack.c.l.b16 %v821
  %v876 = vunpack.c.l.b16 %v822
  %v877 = vpack.c.b16 %v862, %v861
  %v878 = vpack.c.b16 %v864, %v863
  %v879 = vpack.c.b16 %v866, %v865
  %v880 = vpack.c.b16 %v868, %v867
  %v881 = vpack.c.b16 %v870, %v869
  %v882 = vpack.c.b16 %v872, %v871
  %v883 = vpack.c.b16 %v874, %v873
  %v884 = vpack.c.b16 %v876, %v875
  %893 = vmatprep.subr.bf16.mxu0 0
  %894 = vmatpush1.bf16.msra.mxu0 %v877
  %895 = vmatprep.subr.bf16.mxu0 0
  %896 = vmatpush1.bf16.msra.mxu0 %v878
  %897 = vmatprep.subr.bf16.mxu0 0
  %898 = vmatpush1.bf16.msra.mxu0 %v879
  %899 = vmatprep.subr.bf16.mxu0 0
  %900 = vmatpush1.bf16.msra.mxu0 %v880
  %901 = vmatprep.subr.bf16.mxu0 0
  %902 = vmatpush1.bf16.msra.mxu0 %v881
  %903 = vmatprep.subr.bf16.mxu0 0
  %904 = vmatpush1.bf16.msra.mxu0 %v882
  %905 = vmatprep.subr.bf16.mxu0 0
  %906 = vmatpush1.bf16.msra.mxu0 %v883
  %907 = vmatprep.subr.bf16.mxu0 0
  %908 = vmatpush1.bf16.msra.mxu0 %v884
  %909 = vmatprep.subr.bf16.mxu0 0
  %910 = vmatpush1.bf16.msra.mxu0 0
  %911 = vmatprep.subr.bf16.mxu0 0
  %912 = vmatpush1.bf16.msra.mxu0 0
  %913 = vmatprep.subr.bf16.mxu0 0
  %914 = vmatpush1.bf16.msra.mxu0 0
  %915 = vmatprep.subr.bf16.mxu0 0
  %916 = vmatpush1.bf16.msra.mxu0 0
  %917 = vmatprep.subr.bf16.mxu0 0
  %918 = vmatpush1.bf16.msra.mxu0 0
  %919 = vmatprep.subr.bf16.mxu0 0
  %920 = vmatpush1.bf16.msra.mxu0 0
  %921 = vmatprep.subr.bf16.mxu0 0
  %922 = vmatpush1.bf16.msra.mxu0 0
  %923 = vmatprep.subr.bf16.mxu0 0
  %924 = vmatpush1.bf16.msra.mxu0 0
  %925 = vmatprep.mubr.bf16.mxu0 0
  %926 = vmatmul.mubr.bf16.gmra.mrb[0].mxu0 %v840
  %v927 = vpop.f32.mrb[0].mxu0
  %v928 = vadd.f32 %v844, %v927
  %v929 = vpop.f32.mrb[0].mxu0
  %v930 = vpop.f32.mrb[0].mxu0
  %v931 = vpop.f32.mrb[0].mxu0
  %932 = vdwg.mxu0
  %v933 = vmax.f32 %v928, 0.0
  %v934 = vlaneseq
  %v935 = vshrl.u32 %v934, 7
  %v936 = vsub.s32 4, %v935
  %v937 = vrot.slane %v447, %v936
  %v954 = vunpack.c.l.b16 %v824
  %v955 = vunpack.c.l.b16 %v825
  %v956 = vunpack.c.l.b16 %v826
  %v957 = vunpack.c.l.b16 %v827
  %v958 = vunpack.c.l.b16 %v828
  %v959 = vunpack.c.l.b16 %v829
  %v960 = vunpack.c.l.b16 %v830
  %v961 = vunpack.c.l.b16 %v831
  %v962 = vunpack.c.l.b16 %v832
  %v963 = vunpack.c.l.b16 %v833
  %v964 = vunpack.c.l.b16 %v834
  %v965 = vunpack.c.l.b16 %v835
  %v966 = vunpack.c.l.b16 %v836
  %v967 = vunpack.c.l.b16 %v837
  %v968 = vunpack.c.l.b16 %v838
  %v969 = vunpack.c.l.b16 %v839
  %v970 = vpack.c.b16 %v955, %v954
  %v971 = vpack.c.b16 %v957, %v956
  %v972 = vpack.c.b16 %v959, %v958
  %v973 = vpack.c.b16 %v961, %v960
  %v974 = vpack.c.b16 %v963, %v962
  %v975 = vpack.c.b16 %v965, %v964
  %v976 = vpack.c.b16 %v967, %v966
  %v977 = vpack.c.b16 %v969, %v968
  %986 = vmatprep.subr.bf16.mxu0 0
  %987 = vmatpush1.bf16.msra.mxu0 %v970
  %988 = vmatprep.subr.bf16.mxu0 0
  %989 = vmatpush1.bf16.msra.mxu0 %v971
  %990 = vmatprep.subr.bf16.mxu0 0
  %991 = vmatpush1.bf16.msra.mxu0 %v972
  %992 = vmatprep.subr.bf16.mxu0 0
  %993 = vmatpush1.bf16.msra.mxu0 %v973
  %994 = vmatprep.subr.bf16.mxu0 0
  %995 = vmatpush1.bf16.msra.mxu0 %v974
  %996 = vmatprep.subr.bf16.mxu0 0
  %997 = vmatpush1.bf16.msra.mxu0 %v975
  %998 = vmatprep.subr.bf16.mxu0 0
  %999 = vmatpush1.bf16.msra.mxu0 %v976
  %1000 = vmatprep.subr.bf16.mxu0 0
  %1001 = vmatpush1.bf16.msra.mxu0 %v977
  %1002 = vmatprep.subr.bf16.mxu0 0
  %1003 = vmatpush1.bf16.msra.mxu0 0
  %1004 = vmatprep.subr.bf16.mxu0 0
  %1005 = vmatpush1.bf16.msra.mxu0 0
  %1006 = vmatprep.subr.bf16.mxu0 0
  %1007 = vmatpush1.bf16.msra.mxu0 0
  %1008 = vmatprep.subr.bf16.mxu0 0
  %1009 = vmatpush1.bf16.msra.mxu0 0
  %1010 = vmatprep.subr.bf16.mxu0 0
  %1011 = vmatpush1.bf16.msra.mxu0 0
  %1012 = vmatprep.subr.bf16.mxu0 0
  %1013 = vmatpush1.bf16.msra.mxu0 0
  %1014 = vmatprep.subr.bf16.mxu0 0
  %1015 = vmatpush1.bf16.msra.mxu0 0
  %1016 = vmatprep.subr.bf16.mxu0 0
  %1017 = vmatpush1.bf16.msra.mxu0 0
  %1018 = vmatprep.mubr.bf16.mxu0 0
  %1019 = vmatmul.mubr.bf16.gmra.mrb[0].mxu0 %v840
  %v1020 = vpop.f32.mrb[0].mxu0
  %v1021 = vadd.f32 %v937, %v1020
  %v1022 = vpop.f32.mrb[0].mxu0
  %v1023 = vpop.f32.mrb[0].mxu0
  %v1024 = vpop.f32.mrb[0].mxu0
  %1025 = vdwg.mxu0
  %v1026 = vxor.u32 %v1021, 2147483648
  %v1027 = vmul.f32 %v1026, 1.442695
  %v1028 = vpow.pop %v1027
  %v1029 = vadd.f32 %v1028, 1.0
  %v1030 = vrcp.pop %v1029
  %v1031 = vmul.f32 1.0, %v1030
  %v1032 = vmul.f32 %v1031, %v933
  %v1033 = vsub.f32 1.0, %v1031
  %v1034 = vmul.f32 %v1033, %v805
  %v1035 = vadd.f32 %v1032, %v1034
  %v1036 = vpack.c.bf16 %v1035, %v1035
  %v1037 = vld [vmem:[%s7] sm:$0xf]
  %v1038 = vld [vmem:[%s7 + $0x4] sm:$0xf]
  %v1039 = vld [vmem:[%s7 + $0x8] sm:$0xf]
  %v1040 = vld [vmem:[%s7 + $0xc] sm:$0xf]
  %v1041 = vld [vmem:[%s7 + $0x10] sm:$0xf]
  %v1042 = vld [vmem:[%s7 + $0x14] sm:$0xf]
  %v1043 = vld [vmem:[%s7 + $0x18] sm:$0xf]
  %v1044 = vld [vmem:[%s7 + $0x1c] sm:$0xf]
  %v1045 = vld [vmem:[%s7 + $0x20] sm:$0xf]
  %v1046 = vld [vmem:[%s7 + $0x24] sm:$0xf]
  %v1047 = vld [vmem:[%s7 + $0x28] sm:$0xf]
  %v1048 = vld [vmem:[%s7 + $0x2c] sm:$0xf]
  %v1049 = vld [vmem:[%s7 + $0x30] sm:$0xf]
  %v1050 = vld [vmem:[%s7 + $0x34] sm:$0xf]
  %v1051 = vld [vmem:[%s7 + $0x38] sm:$0xf]
  %v1052 = vld [vmem:[%s7 + $0x3c] sm:$0xf]
  %v1053 = vld [vmem:[%s8] sm:$0x1]
  %v1055 = vlaneseq
  %v1056 = vshrl.u32 %v1055, 7
  %v1057 = vsub.s32 0, %v1056
  %v1058 = vrot.slane %v1053, %v1057
  %v1076 = vunpack.c.l.b16 %v1037
  %v1077 = vunpack.c.l.b16 %v1038
  %v1078 = vunpack.c.l.b16 %v1039
  %v1079 = vunpack.c.l.b16 %v1040
  %v1080 = vunpack.c.l.b16 %v1041
  %v1081 = vunpack.c.l.b16 %v1042
  %v1082 = vunpack.c.l.b16 %v1043
  %v1083 = vunpack.c.l.b16 %v1044
  %v1084 = vunpack.c.l.b16 %v1045
  %v1085 = vunpack.c.l.b16 %v1046
  %v1086 = vunpack.c.l.b16 %v1047
  %v1087 = vunpack.c.l.b16 %v1048
  %v1088 = vunpack.c.l.b16 %v1049
  %v1089 = vunpack.c.l.b16 %v1050
  %v1090 = vunpack.c.l.b16 %v1051
  %v1091 = vunpack.c.l.b16 %v1052
  %v1092 = vpack.c.b16 %v1077, %v1076
  %v1093 = vpack.c.b16 %v1079, %v1078
  %v1094 = vpack.c.b16 %v1081, %v1080
  %v1095 = vpack.c.b16 %v1083, %v1082
  %v1096 = vpack.c.b16 %v1085, %v1084
  %v1097 = vpack.c.b16 %v1087, %v1086
  %v1098 = vpack.c.b16 %v1089, %v1088
  %v1099 = vpack.c.b16 %v1091, %v1090
  %1108 = vmatprep.subr.bf16.mxu0 0
  %1109 = vmatpush1.bf16.msra.mxu0 %v1092
  %1110 = vmatprep.subr.bf16.mxu0 0
  %1111 = vmatpush1.bf16.msra.mxu0 %v1093
  %1112 = vmatprep.subr.bf16.mxu0 0
  %1113 = vmatpush1.bf16.msra.mxu0 %v1094
  %1114 = vmatprep.subr.bf16.mxu0 0
  %1115 = vmatpush1.bf16.msra.mxu0 %v1095
  %1116 = vmatprep.subr.bf16.mxu0 0
  %1117 = vmatpush1.bf16.msra.mxu0 %v1096
  %1118 = vmatprep.subr.bf16.mxu0 0
  %1119 = vmatpush1.bf16.msra.mxu0 %v1097
  %1120 = vmatprep.subr.bf16.mxu0 0
  %1121 = vmatpush1.bf16.msra.mxu0 %v1098
  %1122 = vmatprep.subr.bf16.mxu0 0
  %1123 = vmatpush1.bf16.msra.mxu0 %v1099
  %1124 = vmatprep.subr.bf16.mxu0 0
  %1125 = vmatpush1.bf16.msra.mxu0 0
  %1126 = vmatprep.subr.bf16.mxu0 0
  %1127 = vmatpush1.bf16.msra.mxu0 0
  %1128 = vmatprep.subr.bf16.mxu0 0
  %1129 = vmatpush1.bf16.msra.mxu0 0
  %1130 = vmatprep.subr.bf16.mxu0 0
  %1131 = vmatpush1.bf16.msra.mxu0 0
  %1132 = vmatprep.subr.bf16.mxu0 0
  %1133 = vmatpush1.bf16.msra.mxu0 0
  %1134 = vmatprep.subr.bf16.mxu0 0
  %1135 = vmatpush1.bf16.msra.mxu0 0
  %1136 = vmatprep.subr.bf16.mxu0 0
  %1137 = vmatpush1.bf16.msra.mxu0 0
  %1138 = vmatprep.subr.bf16.mxu0 0
  %1139 = vmatpush1.bf16.msra.mxu0 0
  %1140 = vmatprep.mubr.bf16.mxu0 0
  %1141 = vmatmul.mubr.bf16.gmra.mrb[0].mxu0 %v1036
  %v1142 = vpop.f32.mrb[0].mxu0
  %v1143 = vadd.f32 %v1058, %v1142
  %v1144 = vpop.f32.mrb[0].mxu0
  %v1145 = vpop.f32.mrb[0].mxu0
  %v1146 = vpop.f32.mrb[0].mxu0
  %1147 = vdwg.mxu0
  %1148 = vmax.xlane.f32.xlu0 %v1143
  %v1149 = vpop.xlane.xlu0 %1148
  %v1150 = vsub.f32 %v1143, %v1149
  %v1151 = vmul.f32 %v1150, 1.442695
  %v1152 = vpow.pop %v1151
  %1153 = vadd.xlane.f32.xlu0 %v1152
  %v1154 = vpop.xlane.xlu0 %1153
  %v1155 = vlog2.pop %v1154
  %v1156 = vmul.f32 %v1155, 0.6931472
  %v1157 = vadd.f32 %v1149, %v1156
  %v1158 = vsub.f32 %v1143, %v1157
  %1159 = vst [vmem:[%s9] sm:$0xff] %v1158
  // Predicated region
  $region38: #{mcan_reid_forward.1} parent=0 // pred_check
    _
  $region39: #{mcan_reid_forward.1} parent=0 // pred_check_branch
    %1161 = sbr.rel (0) target = $region41
  $region40: #{mcan_reid_forward.1} parent=0 // pred_region
    _
  $region41: #{mcan_reid_forward.1} parent=0 // pred_fallthru
    _
  // Predicated region
  $region42: #{mcan_reid_forward.1} parent=0 // pred_check
    _
  $region43: #{mcan_reid_forward.1} parent=0 // pred_check_branch
    %1163 = sbr.rel (0) target = $region45
  $region44: #{mcan_reid_forward.1} parent=0 // pred_region
    _
  $region45: #{mcan_reid_forward.1} parent=0 // pred_fallthru
    _

</llo_original>
